<compile_context>
chip_gen: v6e
topology: v6e:2x2x1
jax: 0.10.0
libtpu: 0.0.40
codegen_flags: <defaults>
</compile_context>

<pallas_src>
import jax
import jax.numpy as jnp
from jax.experimental import pallas as pl
from jax.experimental.pallas import tpu as pltpu


def _round_up(n, m):
    return ((n + m - 1) // m) * m


def _make_mlp_kernel(n_hidden):
    """Builds a kernel closed over the (static) number of hidden layers."""

    def body(w_in_ref, b_in_ref, w_h_ref, b_h_ref, w_out_ref, b_out_ref,
             x_ref, o_ref):
        # Input layer: (tb, n_in) @ (n_in, width) -> (tb, width) on the MXU.
        h = jnp.dot(x_ref[...], w_in_ref[...],
                    preferred_element_type=jnp.float32)
        h = jnp.maximum(h + b_in_ref[...], 0.0)

        # Hidden layers (unrolled; n_hidden is a Python int).
        for i in range(n_hidden):
            h = jnp.dot(h.astype(w_h_ref.dtype), w_h_ref[i],
                        preferred_element_type=jnp.float32)
            h = jnp.maximum(h + b_h_ref[pl.ds(i, 1), :], 0.0)

        # Output layer (no ReLU).
        out = jnp.dot(h.astype(w_out_ref.dtype), w_out_ref[...],
                      preferred_element_type=jnp.float32)
        o_ref[...] = (out + b_out_ref[...]).astype(o_ref.dtype)

    if n_hidden > 0:
        return body

    def body_no_hidden(w_in_ref, b_in_ref, w_out_ref, b_out_ref, x_ref, o_ref):
        return body(w_in_ref, b_in_ref, None, None, w_out_ref, b_out_ref,
                    x_ref, o_ref)

    return body_no_hidden


def _pick_tile_and_vmem(B, n_in, width, n_out, n_hidden, itemsize):
    """Largest batch tile whose VMEM footprint fits a conservative budget."""
    param_bytes = itemsize * (n_in * width + width
                              + n_hidden * (width * width + width)
                              + width * n_out + n_out)

    def need(t):
        # Conservatively assume the pipeline double-buffers every BlockSpec
        # (params included) and add two (t, width) f32 activation temporaries.
        return (2 * param_bytes
                + 2 * itemsize * t * (n_in + n_out)
                + 2 * 4 * t * width)

    budget = 40 << 20
    b_cap = _round_up(B, 8)
    tb = min(8, b_cap)
    for cand in (2048, 1024, 512, 256, 128, 64, 32, 16, 8):
        if cand <= b_cap and need(cand) <= budget:
            tb = cand
            break

    # If a large batch would fit in a single grid step, split it in two so
    # both TensorCores (v7x megacore) get work.
    if tb >= 512 and _round_up(B, tb) // tb == 1:
        tb = _round_up((B + 1) // 2, 8)

    vmem_limit = int(min(max(need(tb) + (4 << 20), 16 << 20), 56 << 20))
    return tb, vmem_limit


def mlp_forward(x, w_in, b_in, w_h, b_h, w_out, b_out):
    """MLP forward pass.

    x:     (B, n_in)            float32
    w_in:  (n_in, width)        (already transposed vs. torch Linear.weight)
    b_in:  (width,)
    w_h:   (n_hidden, width, width) or None
    b_h:   (n_hidden, width)        or None
    w_out: (width, n_out)
    b_out: (n_out,)
    """
    B, n_in = x.shape
    width = w_in.shape[1]
    n_out = w_out.shape[1]
    n_hidden = 0 if w_h is None else int(w_h.shape[0])

    b_in2 = b_in.reshape(1, width)
    b_out2 = b_out.reshape(1, n_out)

    itemsize = jnp.dtype(x.dtype).itemsize
    tb, vmem_limit = _pick_tile_and_vmem(B, n_in, width, n_out, n_hidden,
                                         itemsize)

    # Pad B up to a multiple of tb with zeros instead of asserting
    # divisibility, then slice the result back.
    Bp = _round_up(B, tb)
    if Bp != B:
        x = jnp.pad(x, ((0, Bp - B), (0, 0)))
    grid = (Bp // tb,)

    const2 = lambda i: (0, 0)
    const3 = lambda i: (0, 0, 0)

    in_specs = [
        pl.BlockSpec((n_in, width), const2),   # W_in   (resident)
        pl.BlockSpec((1, width), const2),      # b_in   (resident)
    ]
    args = [w_in, b_in2]
    if n_hidden > 0:
        in_specs += [
            pl.BlockSpec((n_hidden, width, width), const3),  # W_h (resident)
            pl.BlockSpec((n_hidden, width), const2),         # b_h (resident)
        ]
        args += [w_h, b_h]
    in_specs += [
        pl.BlockSpec((width, n_out), const2),        # W_out  (resident)
        pl.BlockSpec((1, n_out), const2),            # b_out  (resident)
        pl.BlockSpec((tb, n_in), lambda i: (i, 0)),  # x tile (streamed)
    ]
    args += [w_out, b_out2, x]

    kernel = _make_mlp_kernel(n_hidden)

    out = pl.pallas_call(
        kernel,
        out_shape=jax.ShapeDtypeStruct((Bp, n_out), x.dtype),
        grid_spec=pltpu.PrefetchScalarGridSpec(
            num_scalar_prefetch=0,
            grid=grid,
            in_specs=in_specs,
            out_specs=pl.BlockSpec((tb, n_out), lambda i: (i, 0)),
        ),
        compiler_params=pltpu.CompilerParams(
            dimension_semantics=("parallel",),
            vmem_limit_bytes=vmem_limit,
        ),
    )(*args)
    return out[:B]


def mlp_ref(x, w_in, b_in, w_h, b_h, w_out, b_out):
    h = jnp.maximum(x @ w_in + b_in, 0.0)
    if w_h is not None:
        for i in range(w_h.shape[0]):
            h = jnp.maximum(h @ w_h[i] + b_h[i], 0.0)
    return h @ w_out + b_out


if __name__ == "__main__":
    key = jax.random.PRNGKey(0)
    k = jax.random.split(key, 7)

    # Small shapes consistent with the module:
    #   n_inputs=32, mlp_width=128, mlp_depth=3 (-> 1 hidden layer),
    #   n_outputs=16, batch=16.
    B, n_in = 16, 32
    width, n_out = 128, 16
    depth = 3

    x = jax.random.normal(k[0], (B, n_in), dtype=jnp.float32)
    w_in = 0.1 * jax.random.normal(k[1], (n_in, width), dtype=jnp.float32)
    b_in = 0.1 * jax.random.normal(k[2], (width,), dtype=jnp.float32)
    w_h = 0.1 * jax.random.normal(k[3], (depth - 2, width, width),
                                  dtype=jnp.float32)
    b_h = 0.1 * jax.random.normal(k[4], (depth - 2, width), dtype=jnp.float32)
    w_out = 0.1 * jax.random.normal(k[5], (width, n_out), dtype=jnp.float32)
    b_out = 0.1 * jax.random.normal(k[6], (n_out,), dtype=jnp.float32)

    out = mlp_forward(x, w_in, b_in, w_h, b_h, w_out, b_out)
    out = jax.block_until_ready(out)

    ref = mlp_ref(x, w_in, b_in, w_h, b_h, w_out, b_out)
    assert out.shape == (B, n_out)
    assert jnp.allclose(out, ref, atol=2e-3, rtol=2e-3), "mismatch vs reference"

    print("KERNEL_OK")
</pallas_src>

<mosaic_0001>
module attributes {stable_mosaic.version = 11 : i64} {
  func.func @body(%arg0: i32, %arg1: memref<32x128xf32, #tpu.memory_space<vmem>>, %arg2: memref<1x128xf32, #tpu.memory_space<vmem>>, %arg3: memref<1x128x128xf32, #tpu.memory_space<vmem>>, %arg4: memref<1x128xf32, #tpu.memory_space<vmem>>, %arg5: memref<128x16xf32, #tpu.memory_space<vmem>>, %arg6: memref<1x16xf32, #tpu.memory_space<vmem>>, %arg7: memref<16x32xf32, #tpu.memory_space<vmem>>, %arg8: memref<16x16xf32, #tpu.memory_space<vmem>>) attributes {dimension_semantics = [#tpu.dimension_semantics<parallel>], iteration_bounds = array<i64: 1>, scalar_prefetch = 0 : i64, scratch_operands = 0 : i64, tpu.core_type = #tpu.core_type<tc>, window_params = [{pipeline_mode = #tpu.pipeline_mode<synchronous>, transform_indices = @transform_0, window_bounds = array<i64: 32, 128>}, {pipeline_mode = #tpu.pipeline_mode<synchronous>, transform_indices = @transform_1, window_bounds = array<i64: 1, 128>}, {pipeline_mode = #tpu.pipeline_mode<synchronous>, transform_indices = @transform_2, window_bounds = array<i64: 1, 128, 128>}, {pipeline_mode = #tpu.pipeline_mode<synchronous>, transform_indices = @transform_3, window_bounds = array<i64: 1, 128>}, {pipeline_mode = #tpu.pipeline_mode<synchronous>, transform_indices = @transform_4, window_bounds = array<i64: 128, 16>}, {pipeline_mode = #tpu.pipeline_mode<synchronous>, transform_indices = @transform_5, window_bounds = array<i64: 1, 16>}, {transform_indices = @transform_6, window_bounds = array<i64: 16, 32>}, {transform_indices = @transform_7, window_bounds = array<i64: 16, 16>}]} {
    %c0 = arith.constant 0 : index
    %c0_0 = arith.constant 0 : index
    %0 = vector.load %arg7[%c0, %c0_0] : memref<16x32xf32, #tpu.memory_space<vmem>>, vector<16x32xf32>
    %c0_1 = arith.constant 0 : index
    %c0_2 = arith.constant 0 : index
    %1 = vector.load %arg1[%c0_1, %c0_2] : memref<32x128xf32, #tpu.memory_space<vmem>>, vector<32x128xf32>
    %cst = arith.constant dense<0.000000e+00> : vector<16x128xf32>
    %2 = tpu.matmul %0, %1, %cst {dimension_numbers = #tpu.dot_dimension_numbers<[1], [0], [0], [1], [0, 0, 1, 1], [], []>} : vector<16x32xf32>, vector<32x128xf32>, vector<16x128xf32> -> vector<16x128xf32>
    %c0_3 = arith.constant 0 : index
    %c0_4 = arith.constant 0 : index
    %3 = vector.load %arg2[%c0_3, %c0_4] : memref<1x128xf32, #tpu.memory_space<vmem>>, vector<1x128xf32>
    %4 = vector.broadcast %3 : vector<1x128xf32> to vector<16x128xf32>
    %5 = arith.addf %2, %4 : vector<16x128xf32>
    %cst_5 = arith.constant 0.000000e+00 : f32
    %6 = vector.broadcast %cst_5 : f32 to vector<16x128xf32>
    %7 = arith.maximumf %5, %6 : vector<16x128xf32>
    %c0_6 = arith.constant 0 : index
    %c0_7 = arith.constant 0 : index
    %c0_8 = arith.constant 0 : index
    %8 = vector.load %arg3[%c0_6, %c0_7, %c0_8] : memref<1x128x128xf32, #tpu.memory_space<vmem>>, vector<1x128x128xf32>
    %9 = vector.shape_cast %8 : vector<1x128x128xf32> to vector<128x128xf32>
    %cst_9 = arith.constant dense<0.000000e+00> : vector<16x128xf32>
    %10 = tpu.matmul %7, %9, %cst_9 {dimension_numbers = #tpu.dot_dimension_numbers<[1], [0], [0], [1], [0, 0, 1, 1], [], []>} : vector<16x128xf32>, vector<128x128xf32>, vector<16x128xf32> -> vector<16x128xf32>
    %c0_10 = arith.constant 0 : index
    %c0_11 = arith.constant 0 : index
    %11 = vector.load %arg4[%c0_10, %c0_11] : memref<1x128xf32, #tpu.memory_space<vmem>>, vector<1x128xf32>
    %12 = vector.broadcast %11 : vector<1x128xf32> to vector<16x128xf32>
    %13 = arith.addf %10, %12 : vector<16x128xf32>
    %cst_12 = arith.constant 0.000000e+00 : f32
    %14 = vector.broadcast %cst_12 : f32 to vector<16x128xf32>
    %15 = arith.maximumf %13, %14 : vector<16x128xf32>
    %c0_13 = arith.constant 0 : index
    %c0_14 = arith.constant 0 : index
    %16 = vector.load %arg5[%c0_13, %c0_14] : memref<128x16xf32, #tpu.memory_space<vmem>>, vector<128x16xf32>
    %cst_15 = arith.constant dense<0.000000e+00> : vector<16x16xf32>
    %17 = tpu.matmul %15, %16, %cst_15 {dimension_numbers = #tpu.dot_dimension_numbers<[1], [0], [0], [1], [0, 0, 1, 1], [], []>} : vector<16x128xf32>, vector<128x16xf32>, vector<16x16xf32> -> vector<16x16xf32>
    %c0_16 = arith.constant 0 : index
    %c0_17 = arith.constant 0 : index
    %18 = vector.load %arg6[%c0_16, %c0_17] : memref<1x16xf32, #tpu.memory_space<vmem>>, vector<1x16xf32>
    %19 = vector.broadcast %18 : vector<1x16xf32> to vector<16x16xf32>
    %20 = arith.addf %17, %19 : vector<16x16xf32>
    %c0_18 = arith.constant 0 : index
    %c0_19 = arith.constant 0 : index
    %21 = vector.load %arg8[%c0_18, %c0_19] : memref<16x16xf32, #tpu.memory_space<vmem>>, vector<16x16xf32>
    tpu.vector_store %arg8[%c0_18, %c0_19], %20 {strides = array<i32>} : memref<16x16xf32, #tpu.memory_space<vmem>>, vector<16x16xf32>,
    return
  }
  func.func @transform_0(%arg0: i32) -> (i32, i32) {
    %c0_i32 = arith.constant 0 : i32
    %c0_i32_0 = arith.constant 0 : i32
    %c0_i32_1 = arith.constant 0 : i32
    return %c0_i32, %c0_i32_0 : i32, i32
  }
  func.func @transform_1(%arg0: i32) -> (i32, i32) {
    %c0_i32 = arith.constant 0 : i32
    %c0_i32_0 = arith.constant 0 : i32
    %c0_i32_1 = arith.constant 0 : i32
    return %c0_i32, %c0_i32_0 : i32, i32
  }
  func.func @transform_2(%arg0: i32) -> (i32, i32, i32) {
    %c0_i32 = arith.constant 0 : i32
    %c0_i32_0 = arith.constant 0 : i32
    %c0_i32_1 = arith.constant 0 : i32
    %c0_i32_2 = arith.constant 0 : i32
    return %c0_i32, %c0_i32_0, %c0_i32_1 : i32, i32, i32
  }
  func.func @transform_3(%arg0: i32) -> (i32, i32) {
    %c0_i32 = arith.constant 0 : i32
    %c0_i32_0 = arith.constant 0 : i32
    %c0_i32_1 = arith.constant 0 : i32
    return %c0_i32, %c0_i32_0 : i32, i32
  }
  func.func @transform_4(%arg0: i32) -> (i32, i32) {
    %c0_i32 = arith.constant 0 : i32
    %c0_i32_0 = arith.constant 0 : i32
    %c0_i32_1 = arith.constant 0 : i32
    return %c0_i32, %c0_i32_0 : i32, i32
  }
  func.func @transform_5(%arg0: i32) -> (i32, i32) {
    %c0_i32 = arith.constant 0 : i32
    %c0_i32_0 = arith.constant 0 : i32
    %c0_i32_1 = arith.constant 0 : i32
    return %c0_i32, %c0_i32_0 : i32, i32
  }
  func.func @transform_6(%arg0: i32) -> (i32, i32) {
    %c0_i32 = arith.constant 0 : i32
    %c0_i32_0 = arith.constant 0 : i32
    return %arg0, %c0_i32 : i32, i32
  }
  func.func @transform_7(%arg0: i32) -> (i32, i32) {
    %c0_i32 = arith.constant 0 : i32
    %c0_i32_0 = arith.constant 0 : i32
    return %arg0, %c0_i32 : i32, i32
  }
}

</mosaic_0001>

<llo_original>
// kernel: tpu_custom_call.1
$region0: #{tpu_custom_call.1}
  #allocation0 [shape = 'u32[]', space=smem, size = 0x4, offset = 0x4, fixed_abs, tag = 'smem constant byte address 0x4 - core index']
  #allocation1 [shape = 'u32[144,128]{1,0:T(1,128)}', space=vmem, size = 0x12000, scoped, tag = 'internal scratch']
  %s0 = inlined_call_operand.hbm [shape: f32[32,128], index: 0, kind: input, shape index: {}]
  %s1 = inlined_call_operand.vmem [shape: f32[1,128], index: 1, kind: input, shape index: {}]
  %s2 = inlined_call_operand.vmem [shape: f32[1,128,128], index: 2, kind: input, shape index: {}]
  %s3 = inlined_call_operand.vmem [shape: f32[1,128], index: 3, kind: input, shape index: {}]
  %s4 = inlined_call_operand.vmem [shape: f32[128,16], index: 4, kind: input, shape index: {}]
  %s5 = inlined_call_operand.vmem [shape: f32[1,16], index: 5, kind: input, shape index: {}]
  %s6 = inlined_call_operand.vmem [shape: f32[16,32], index: 6, kind: input, shape index: {}]
  %s7 = inlined_call_operand.hbm [shape: f32[16,16], index: 7, kind: output, shape index: {}]
  %s8 = sld [smem:[#allocation0]]
  $region42: #{tpu_custom_call.1} parent=0
    _
  %s10 = ssub.s32 1, %s8
  %s11 = scalar_select 0, %s10, %s8
  $region1: #{tpu_custom_call.1} parent=0
    #allocation2 [shape = 'u8[16384]{0}', space=vmem, size = 0x4000, scoped, tag = 'input window, operand 0, single buffered']
    #allocation3 [shape = 's32[1]{0}', space=sflag, size = 0x4, scoped, tag = 'scoped memory for tpu_custom_call.1']
    #allocation4 [shape = 's32[1]{0}', space=sflag, size = 0x4, scoped, tag = 'scoped memory for tpu_custom_call.1']
    #allocation5 [shape = 'u8[8192]{0}', space=vmem, size = 0x2000, scoped, tag = 'output window, operand 0, single buffered']
    %12 = vsyncpa [#allocation3], 0
    %13 = vsyncpa [#allocation4], 0
    // Predicated region
    $region2: #{tpu_custom_call.1} parent=1 // pred_check
      _
    $region3: #{tpu_custom_call.1} parent=1 // pred_check_branch
      %15 = sbr.rel (0) target = $region5
    $region4: #{tpu_custom_call.1} parent=1 // pred_region
      %s17 = ssub.s32 512, 512
      %18 = vsyncadd [#allocation3], %s17
      %s19 = sshll.u32 [#allocation2], 4
      %s20 = int_to_ptr.vmem [resolvable:$true] %s19
      %25 = dma.hbm_to_vmem [thread:$0]  %s0, 512, %s20, [#allocation3], 128, 128, 8
    $region5: #{tpu_custom_call.1} parent=1 // pred_fallthru
      _
    // Predicated region
    $region6: #{tpu_custom_call.1} parent=1 // pred_check
      _
    $region7: #{tpu_custom_call.1} parent=1 // pred_check_branch
      %27 = sbr.rel (0) target = $region9
    $region8: #{tpu_custom_call.1} parent=1 // pred_region
      _
    $region9: #{tpu_custom_call.1} parent=1 // pred_fallthru
      _
    // Predicated region
    $region10: #{tpu_custom_call.1} parent=1 // pred_check
      _
    $region11: #{tpu_custom_call.1} parent=1 // pred_check_branch
      %29 = sbr.rel (0) target = $region13
    $region12: #{tpu_custom_call.1} parent=1 // pred_region
      _
    $region13: #{tpu_custom_call.1} parent=1 // pred_fallthru
      _
    // Predicated region
    $region14: #{tpu_custom_call.1} parent=1 // pred_check
      _
    $region15: #{tpu_custom_call.1} parent=1 // pred_check_branch
      %31 = sbr.rel (0) target = $region17
    $region16: #{tpu_custom_call.1} parent=1 // pred_region
      _
    $region17: #{tpu_custom_call.1} parent=1 // pred_fallthru
      _
    // Predicated region
    $region18: #{tpu_custom_call.1} parent=1 // pred_check
      _
    $region19: #{tpu_custom_call.1} parent=1 // pred_check_branch
      %33 = sbr.rel (0) target = $region21
    $region20: #{tpu_custom_call.1} parent=1 // pred_region
      _
    $region21: #{tpu_custom_call.1} parent=1 // pred_fallthru
      _
    // Predicated region
    $region22: #{tpu_custom_call.1} parent=1 // pred_check
      _
    $region23: #{tpu_custom_call.1} parent=1 // pred_check_branch
      %35 = sbr.rel (0) target = $region25
    $region24: #{tpu_custom_call.1} parent=1 // pred_region
      _
    $region25: #{tpu_custom_call.1} parent=1 // pred_fallthru
      _
    // Predicated region
    $region26: #{tpu_custom_call.1} parent=1 // pred_check
      _
    $region27: #{tpu_custom_call.1} parent=1 // pred_check_branch
      %37 = sbr.rel (0) target = $region29
    $region28: #{tpu_custom_call.1} parent=1 // pred_region
      _
    $region29: #{tpu_custom_call.1} parent=1 // pred_fallthru
      _
    // Predicated region
    $region30: #{tpu_custom_call.1} parent=1 // pred_check
      _
    $region31: #{tpu_custom_call.1} parent=1 // pred_check_branch
      %39 = sbr.rel (0) target = $region33
    $region32: #{tpu_custom_call.1} parent=1 // pred_region
      %40 = dma.done [#allocation3], 512
    $region33: #{tpu_custom_call.1} parent=1 // pred_fallthru
      _
    %v41 = vld [vmem:[%s6] sm:$0xff]
    %v42 = vld [vmem:[%s6 + $0x8] sm:$0xff]
    %v43 = vld [vmem:[#allocation2] sm:$0xff]
    %v44 = vld [vmem:[#allocation2 + $0x8] sm:$0xff]
    %v45 = vld [vmem:[#allocation2 + $0x10] sm:$0xff]
    %v46 = vld [vmem:[#allocation2 + $0x18] sm:$0xff]
    %v47 = vld [vmem:[%s1] sm:$0x1]
    %v49 = vlaneseq
    %v50 = vshrl.u32 %v49, 7
    %v51 = vsub.s32 0, %v50
    %v52 = vrot.slane %v47, %v51
    %vm54 = vcmask 261120
    %v56 = vsel %vm54, %v41, 0
    %v59 = vsel %vm54, %v42, 0
    %61 = vmatprep.subr.mxu0 0.0
    %62 = vmatpush1.msra.mxu0 0.0
    %63 = vmatprep.subr.mxu0 0.0
    %64 = vmatpush1.msra.mxu0 0.0
    %65 = vmatprep.subr.mxu0 0.0
    %66 = vmatpush1.msra.mxu0 0.0
    %67 = vmatprep.subr.mxu0 0.0
    %68 = vmatpush1.msra.mxu0 0.0
    %69 = vmatprep.subr.mxu0 0.0
    %70 = vmatpush1.msra.mxu0 0.0
    %71 = vmatprep.subr.mxu0 0.0
    %72 = vmatpush1.msra.mxu0 0.0
    %73 = vmatprep.subr.mxu0 0.0
    %74 = vmatpush1.msra.mxu0 0.0
    %75 = vmatprep.subr.mxu0 0.0
    %76 = vmatpush1.msra.mxu0 0.0
    %77 = vmatprep.subr.mxu0 0.0
    %78 = vmatpush1.msra.mxu0 0.0
    %79 = vmatprep.subr.mxu0 0.0
    %80 = vmatpush1.msra.mxu0 0.0
    %81 = vmatprep.subr.mxu0 0.0
    %82 = vmatpush1.msra.mxu0 0.0
    %83 = vmatprep.subr.mxu0 0.0
    %84 = vmatpush1.msra.mxu0 0.0
    %85 = vmatprep.subr.mxu0 0.0
    %86 = vmatpush1.msra.mxu0 %v46
    %87 = vmatprep.subr.mxu0 0.0
    %88 = vmatpush1.msra.mxu0 %v45
    %89 = vmatprep.subr.mxu0 0.0
    %90 = vmatpush1.msra.mxu0 %v44
    %91 = vmatprep.subr.mxu0 0.0
    %92 = vmatpush1.msra.mxu0 %v43
    %93 = vmatprep.subr.mxu0 0.0
    %94 = vmatpush2.msra.mxu0 0.0
    %95 = vmatprep.subr.mxu0 0.0
    %96 = vmatpush2.msra.mxu0 0.0
    %97 = vmatprep.subr.mxu0 0.0
    %98 = vmatpush2.msra.mxu0 0.0
    %99 = vmatprep.subr.mxu0 0.0
    %100 = vmatpush2.msra.mxu0 0.0
    %101 = vmatprep.subr.mxu0 0.0
    %102 = vmatpush2.msra.mxu0 0.0
    %103 = vmatprep.subr.mxu0 0.0
    %104 = vmatpush2.msra.mxu0 0.0
    %105 = vmatprep.subr.mxu0 0.0
    %106 = vmatpush2.msra.mxu0 0.0
    %107 = vmatprep.subr.mxu0 0.0
    %108 = vmatpush2.msra.mxu0 0.0
    %109 = vmatprep.subr.mxu0 0.0
    %110 = vmatpush2.msra.mxu0 0.0
    %111 = vmatprep.subr.mxu0 0.0
    %112 = vmatpush2.msra.mxu0 0.0
    %113 = vmatprep.subr.mxu0 0.0
    %114 = vmatpush2.msra.mxu0 0.0
    %115 = vmatprep.subr.mxu0 0.0
    %116 = vmatpush2.msra.mxu0 0.0
    %117 = vmatprep.subr.mxu0 0.0
    %118 = vmatpush2.msra.mxu0 0.0
    %119 = vmatprep.subr.mxu0 0.0
    %120 = vmatpush2.msra.mxu0 0.0
    %121 = vmatprep.subr.mxu0 0.0
    %122 = vmatpush2.msra.mxu0 0.0
    %123 = vmatprep.subr.mxu0 0.0
    %124 = vmatpush2.msra.mxu0 0.0
    %125 = vmatprep.mubr.f32.mxu0 0.0
    %126 = vmatmul.mubr.f32.gmra.mxu0 %v56
    %v127 = vpop.f32.mrf.mxu0
    %v128 = vadd.f32 %v52, %v127
    %v129 = vpop.f32.mrf.mxu0
    %130 = vmatprep.mubr.f32.mxu0 0.0
    %131 = vmatmul.mubr.f32.gmra.mxu0 %v59
    %v132 = vpop.f32.mrf.mxu0
    %v133 = vadd.f32 %v52, %v132
    %v134 = vpop.f32.mrf.mxu0
    %135 = vdwg.mxu0
    %v136 = vmax.f32 %v128, 0.0
    %v137 = vmax.f32 %v133, 0.0
    %v138 = vld [vmem:[%s2] sm:$0xff]
    %v139 = vld [vmem:[%s2 + $0x8] sm:$0xff]
    %v140 = vld [vmem:[%s2 + $0x10] sm:$0xff]
    %v141 = vld [vmem:[%s2 + $0x18] sm:$0xff]
    %v142 = vld [vmem:[%s2 + $0x20] sm:$0xff]
    %v143 = vld [vmem:[%s2 + $0x28] sm:$0xff]
    %v144 = vld [vmem:[%s2 + $0x30] sm:$0xff]
    %v145 = vld [vmem:[%s2 + $0x38] sm:$0xff]
    %v146 = vld [vmem:[%s2 + $0x40] sm:$0xff]
    %v147 = vld [vmem:[%s2 + $0x48] sm:$0xff]
    %v148 = vld [vmem:[%s2 + $0x50] sm:$0xff]
    %v149 = vld [vmem:[%s2 + $0x58] sm:$0xff]
    %v150 = vld [vmem:[%s2 + $0x60] sm:$0xff]
    %v151 = vld [vmem:[%s2 + $0x68] sm:$0xff]
    %v152 = vld [vmem:[%s2 + $0x70] sm:$0xff]
    %v153 = vld [vmem:[%s2 + $0x78] sm:$0xff]
    %v154 = vld [vmem:[%s3] sm:$0x1]
    %v156 = vlaneseq
    %v157 = vshrl.u32 %v156, 7
    %v158 = vsub.s32 0, %v157
    %v159 = vrot.slane %v154, %v158
    %161 = vmatprep.subr.mxu0 0.0
    %162 = vmatpush1.msra.mxu0 %v153
    %163 = vmatprep.subr.mxu0 0.0
    %164 = vmatpush1.msra.mxu0 %v152
    %165 = vmatprep.subr.mxu0 0.0
    %166 = vmatpush1.msra.mxu0 %v151
    %167 = vmatprep.subr.mxu0 0.0
    %168 = vmatpush1.msra.mxu0 %v150
    %169 = vmatprep.subr.mxu0 0.0
    %170 = vmatpush1.msra.mxu0 %v149
    %171 = vmatprep.subr.mxu0 0.0
    %172 = vmatpush1.msra.mxu0 %v148
    %173 = vmatprep.subr.mxu0 0.0
    %174 = vmatpush1.msra.mxu0 %v147
    %175 = vmatprep.subr.mxu0 0.0
    %176 = vmatpush1.msra.mxu0 %v146
    %177 = vmatprep.subr.mxu0 0.0
    %178 = vmatpush1.msra.mxu0 %v145
    %179 = vmatprep.subr.mxu0 0.0
    %180 = vmatpush1.msra.mxu0 %v144
    %181 = vmatprep.subr.mxu0 0.0
    %182 = vmatpush1.msra.mxu0 %v143
    %183 = vmatprep.subr.mxu0 0.0
    %184 = vmatpush1.msra.mxu0 %v142
    %185 = vmatprep.subr.mxu0 0.0
    %186 = vmatpush1.msra.mxu0 %v141
    %187 = vmatprep.subr.mxu0 0.0
    %188 = vmatpush1.msra.mxu0 %v140
    %189 = vmatprep.subr.mxu0 0.0
    %190 = vmatpush1.msra.mxu0 %v139
    %191 = vmatprep.subr.mxu0 0.0
    %192 = vmatpush1.msra.mxu0 %v138
    %193 = vmatprep.subr.mxu0 0.0
    %194 = vmatpush2.msra.mxu0 0.0
    %195 = vmatprep.subr.mxu0 0.0
    %196 = vmatpush2.msra.mxu0 0.0
    %197 = vmatprep.subr.mxu0 0.0
    %198 = vmatpush2.msra.mxu0 0.0
    %199 = vmatprep.subr.mxu0 0.0
    %200 = vmatpush2.msra.mxu0 0.0
    %201 = vmatprep.subr.mxu0 0.0
    %202 = vmatpush2.msra.mxu0 0.0
    %203 = vmatprep.subr.mxu0 0.0
    %204 = vmatpush2.msra.mxu0 0.0
    %205 = vmatprep.subr.mxu0 0.0
    %206 = vmatpush2.msra.mxu0 0.0
    %207 = vmatprep.subr.mxu0 0.0
    %208 = vmatpush2.msra.mxu0 0.0
    %209 = vmatprep.subr.mxu0 0.0
    %210 = vmatpush2.msra.mxu0 0.0
    %211 = vmatprep.subr.mxu0 0.0
    %212 = vmatpush2.msra.mxu0 0.0
    %213 = vmatprep.subr.mxu0 0.0
    %214 = vmatpush2.msra.mxu0 0.0
    %215 = vmatprep.subr.mxu0 0.0
    %216 = vmatpush2.msra.mxu0 0.0
    %217 = vmatprep.subr.mxu0 0.0
    %218 = vmatpush2.msra.mxu0 0.0
    %219 = vmatprep.subr.mxu0 0.0
    %220 = vmatpush2.msra.mxu0 0.0
    %221 = vmatprep.subr.mxu0 0.0
    %222 = vmatpush2.msra.mxu0 0.0
    %223 = vmatprep.subr.mxu0 0.0
    %224 = vmatpush2.msra.mxu0 0.0
    %225 = vmatprep.mubr.f32.mxu0 0.0
    %226 = vmatmul.mubr.f32.gmra.mxu0 %v136
    %v227 = vpop.f32.mrf.mxu0
    %v228 = vadd.f32 %v159, %v227
    %v229 = vpop.f32.mrf.mxu0
    %230 = vmatprep.mubr.f32.mxu0 0.0
    %231 = vmatmul.mubr.f32.gmra.mxu0 %v137
    %v232 = vpop.f32.mrf.mxu0
    %v233 = vadd.f32 %v159, %v232
    %v234 = vpop.f32.mrf.mxu0
    %235 = vdwg.mxu0
    %v236 = vmax.f32 %v228, 0.0
    %v237 = vmax.f32 %v233, 0.0
    %v238 = vld [vmem:[%s4] sm:$0xff]
    %v239 = vld [vmem:[%s4 + $0x8] sm:$0xff]
    %v240 = vld [vmem:[%s4 + $0x10] sm:$0xff]
    %v241 = vld [vmem:[%s4 + $0x18] sm:$0xff]
    %v242 = vld [vmem:[%s4 + $0x20] sm:$0xff]
    %v243 = vld [vmem:[%s4 + $0x28] sm:$0xff]
    %v244 = vld [vmem:[%s4 + $0x30] sm:$0xff]
    %v245 = vld [vmem:[%s4 + $0x38] sm:$0xff]
    %v246 = vld [vmem:[%s4 + $0x40] sm:$0xff]
    %v247 = vld [vmem:[%s4 + $0x48] sm:$0xff]
    %v248 = vld [vmem:[%s4 + $0x50] sm:$0xff]
    %v249 = vld [vmem:[%s4 + $0x58] sm:$0xff]
    %v250 = vld [vmem:[%s4 + $0x60] sm:$0xff]
    %v251 = vld [vmem:[%s4 + $0x68] sm:$0xff]
    %v252 = vld [vmem:[%s4 + $0x70] sm:$0xff]
    %v253 = vld [vmem:[%s4 + $0x78] sm:$0xff]
    %v254 = vld [vmem:[%s5] sm:$0x1]
    %v256 = vlaneseq
    %v257 = vshrl.u32 %v256, 7
    %v258 = vsub.s32 0, %v257
    %v259 = vrot.slane %v254, %v258
    %261 = vmatprep.subr.mxu0 0.0
    %262 = vmatpush1.msra.mxu0 %v253
    %263 = vmatprep.subr.mxu0 0.0
    %264 = vmatpush1.msra.mxu0 %v252
    %265 = vmatprep.subr.mxu0 0.0
    %266 = vmatpush1.msra.mxu0 %v251
    %267 = vmatprep.subr.mxu0 0.0
    %268 = vmatpush1.msra.mxu0 %v250
    %269 = vmatprep.subr.mxu0 0.0
    %270 = vmatpush1.msra.mxu0 %v249
    %271 = vmatprep.subr.mxu0 0.0
    %272 = vmatpush1.msra.mxu0 %v248
    %273 = vmatprep.subr.mxu0 0.0
    %274 = vmatpush1.msra.mxu0 %v247
    %275 = vmatprep.subr.mxu0 0.0
    %276 = vmatpush1.msra.mxu0 %v246
    %277 = vmatprep.subr.mxu0 0.0
    %278 = vmatpush1.msra.mxu0 %v245
    %279 = vmatprep.subr.mxu0 0.0
    %280 = vmatpush1.msra.mxu0 %v244
    %281 = vmatprep.subr.mxu0 0.0
    %282 = vmatpush1.msra.mxu0 %v243
    %283 = vmatprep.subr.mxu0 0.0
    %284 = vmatpush1.msra.mxu0 %v242
    %285 = vmatprep.subr.mxu0 0.0
    %286 = vmatpush1.msra.mxu0 %v241
    %287 = vmatprep.subr.mxu0 0.0
    %288 = vmatpush1.msra.mxu0 %v240
    %289 = vmatprep.subr.mxu0 0.0
    %290 = vmatpush1.msra.mxu0 %v239
    %291 = vmatprep.subr.mxu0 0.0
    %292 = vmatpush1.msra.mxu0 %v238
    %293 = vmatprep.subr.mxu0 0.0
    %294 = vmatpush2.msra.mxu0 0.0
    %295 = vmatprep.subr.mxu0 0.0
    %296 = vmatpush2.msra.mxu0 0.0
    %297 = vmatprep.subr.mxu0 0.0
    %298 = vmatpush2.msra.mxu0 0.0
    %299 = vmatprep.subr.mxu0 0.0
    %300 = vmatpush2.msra.mxu0 0.0
    %301 = vmatprep.subr.mxu0 0.0
    %302 = vmatpush2.msra.mxu0 0.0
    %303 = vmatprep.subr.mxu0 0.0
    %304 = vmatpush2.msra.mxu0 0.0
    %305 = vmatprep.subr.mxu0 0.0
    %306 = vmatpush2.msra.mxu0 0.0
    %307 = vmatprep.subr.mxu0 0.0
    %308 = vmatpush2.msra.mxu0 0.0
    %309 = vmatprep.subr.mxu0 0.0
    %310 = vmatpush2.msra.mxu0 0.0
    %311 = vmatprep.subr.mxu0 0.0
    %312 = vmatpush2.msra.mxu0 0.0
    %313 = vmatprep.subr.mxu0 0.0
    %314 = vmatpush2.msra.mxu0 0.0
    %315 = vmatprep.subr.mxu0 0.0
    %316 = vmatpush2.msra.mxu0 0.0
    %317 = vmatprep.subr.mxu0 0.0
    %318 = vmatpush2.msra.mxu0 0.0
    %319 = vmatprep.subr.mxu0 0.0
    %320 = vmatpush2.msra.mxu0 0.0
    %321 = vmatprep.subr.mxu0 0.0
    %322 = vmatpush2.msra.mxu0 0.0
    %323 = vmatprep.subr.mxu0 0.0
    %324 = vmatpush2.msra.mxu0 0.0
    %325 = vmatprep.mubr.f32.mxu0 0.0
    %326 = vmatmul.mubr.f32.gmra.mxu0 %v236
    %v327 = vpop.f32.mrf.mxu0
    %v328 = vadd.f32 %v259, %v327
    %v329 = vpop.f32.mrf.mxu0
    %330 = vmatprep.mubr.f32.mxu0 0.0
    %331 = vmatmul.mubr.f32.gmra.mxu0 %v237
    %v332 = vpop.f32.mrf.mxu0
    %v333 = vadd.f32 %v259, %v332
    %v334 = vpop.f32.mrf.mxu0
    %335 = vdwg.mxu0
    %vm336 = vcmask 130048
    %337 = vst.msk [vmem:[#allocation5] sm:$0xff] %vm336, %v328
    %338 = vst.msk [vmem:[#allocation5 + $0x8] sm:$0xff] %vm336, %v333
    // Predicated region
    $region34: #{tpu_custom_call.1} parent=1 // pred_check
      _
    $region35: #{tpu_custom_call.1} parent=1 // pred_check_branch
      %340 = sbr.rel (0) target = $region37
    $region36: #{tpu_custom_call.1} parent=1 // pred_region
      %s342 = ssub.s32 256, 256
      %343 = vsyncadd [#allocation4], %s342
      %s344 = sshll.u32 [#allocation5], 4
      %s345 = int_to_ptr.vmem [resolvable:$true] %s344
      %350 = dma.vmem_to_hbm [thread:$0]  %s345, 256, %s7, [#allocation4], 128, 128, 8
    $region37: #{tpu_custom_call.1} parent=1 // pred_fallthru
      _
    // Predicated region
    $region38: #{tpu_custom_call.1} parent=1 // pred_check
      _
    $region39: #{tpu_custom_call.1} parent=1 // pred_check_branch
      %352 = sbr.rel (0) target = $region41
    $region40: #{tpu_custom_call.1} parent=1 // pred_region
      %353 = dma.done [#allocation4], 256
    $region41: #{tpu_custom_call.1} parent=1 // pred_fallthru
      _
    %354 = vsyncpa [#allocation3], 1
    %355 = vsyncpa [#allocation4], 1

</llo_original>
